<compile_context>
chip_gen: v7x
topology: tpu7x:2x2x1
jax: 0.10.0
libtpu: 0.0.40
codegen_flags: <defaults>
</compile_context>

<pallas_src>
import functools

import jax
import jax.numpy as jnp
from jax.experimental import pallas as pl
from jax.experimental.pallas import tpu as pltpu


def _nlnl_kernel(pred_ref, w_ref, lneg_ref, out_ref, acc_ref,
                 *, n_total, tile_n, blocks_per_core, ln_neg):
    core = pl.program_id(0)
    i = pl.program_id(1)

    @pl.when(i == 0)
    def _init():
        acc_ref[...] = jnp.zeros_like(acc_ref)

    x = pred_ref[...].astype(jnp.float32)          # (C, tile_n), cast in-kernel only
    w_i = w_ref[...]                               # (1, tile_n) f32 = weight[labels]
    lneg = lneg_ref[...]                           # (ln_neg, tile_n) int32

    c, tn = x.shape

    # True column (sample) index of each lane; masks the padded tail and any
    # fully-out-of-range (clamped) block on the short core.
    col = (jax.lax.broadcasted_iota(jnp.int32, (1, tn), 1)
           + (core * blocks_per_core + i) * tile_n)
    valid = col < n_total                          # (1, tile_n) bool

    class_iota = jax.lax.broadcasted_iota(jnp.int32, (c, tn), 0)

    # Softmax pieces: one exp pass; reductions over the short sublane axis.
    m = jnp.max(x, axis=0, keepdims=True)          # (1, tile_n)
    e = jnp.exp(x - m)                             # (C, tile_n)
    s = jnp.sum(e, axis=0, keepdims=True)          # (1, tile_n)
    log_s = jnp.log(s)                             # (1, tile_n)

    partial = jnp.zeros((1, tn), jnp.float32)
    for j in range(ln_neg):                        # static; ln_neg is tiny (default 1)
        ln = lneg[j:j + 1, :]                      # (1, tile_n)
        # Complementary mass summed directly (no s - e_ln cancellation).
        e_others = jnp.sum(jnp.where(class_iota == ln, 0.0, e),
                           axis=0, keepdims=True)  # (1, tile_n)
        # log(clamp(1 - p_ln, 1e-5, 1)) == log(max(e_others, 1e-5*s)) - log(s)
        log_term = jnp.log(jnp.maximum(e_others, jnp.float32(1e-5) * s)) - log_s
        partial = partial + log_term

    acc_ref[...] += jnp.where(valid, -w_i * partial, 0.0)

    @pl.when(i == pl.num_programs(1) - 1)
    def _finalize():
        # Positive CE term: all targets are -100 (ignored) and it is scaled by the number
        # of valid (>=0) targets, i.e. 0 -> it contributes exactly 0 to the loss here.
        out_ref[0, 0] = jnp.sum(acc_ref[...])


def _choose_tile_n(n, c, itemsize):
    """Lane-tile (batch columns per block), budgeted on the padded VMEM footprint."""
    cpad = -(-c // 8) * 8
    per_col = (2 * cpad * itemsize     # pred input block, double-buffered, native dtype
               + 2 * cpad * 4          # in-kernel f32 intermediates (x - m, e)
               + 2 * 8 * 4             # w_i block, sublane-padded, double-buffered
               + 2 * 8 * 4             # labels_neg block, sublane-padded, double-buffered
               + 8 * 4 * 4)            # (1, tile) f32 temporaries + accumulator scratch
    budget = 12 * 1024 * 1024          # live-VMEM target: safe on v5e/v6e/v7x scoped limits
    tile = budget // max(per_col, 1)
    tile = max(128, min(tile, 64 * 1024))
    tile = (tile // 128) * 128         # lane axis: multiples of 128
    if n <= tile:
        return n                       # single block: block shape == full array dims
    return tile


def nlnl_loss(pred, labels, labels_neg, weight):
    """NLNL forward.

    pred:       (N, C) logits (any float dtype; cast to f32 in-kernel)
    labels:     (N,)   int   true labels (only used for the per-sample class weight)
    labels_neg: (N, L) int   complementary ("negative") labels, always != labels
    weight:     (C,)   float per-class weights (NLNL's 1/(freq/max) weights; ones if balanced)
    Returns the scalar NLNL loss (float32).
    """
    n, c = pred.shape
    labels_neg = labels_neg.reshape(n, -1)
    ln_neg = labels_neg.shape[1]

    # Lane-dense layout: classes on sublanes, batch on lanes.
    pred_t = pred.T                                                    # (C, N)
    w_i = weight.astype(jnp.float32)[labels.astype(jnp.int32)].reshape(1, n)
    lneg_t = labels_neg.astype(jnp.int32).T                            # (ln_neg, N)

    tile_n = _choose_tile_n(n, c, jnp.dtype(pred.dtype).itemsize)
    num_blocks = pl.cdiv(n, tile_n)
    num_cores = 2 if num_blocks >= 2 else 1          # v7x megacore split; harmless elsewhere
    blocks_per_core = pl.cdiv(num_blocks, num_cores)

    def _block(core, i):
        # Clamp so the short core never issues a fully out-of-range DMA; its lanes are
        # masked in-kernel via the true column index.
        return jnp.minimum(core * blocks_per_core + i, num_blocks - 1)

    kernel = functools.partial(_nlnl_kernel, n_total=n, tile_n=tile_n,
                               blocks_per_core=blocks_per_core, ln_neg=ln_neg)

    partials = pl.pallas_call(
        kernel,
        out_shape=jax.ShapeDtypeStruct((num_cores, 1), jnp.float32),
        grid_spec=pltpu.PrefetchScalarGridSpec(
            num_scalar_prefetch=0,
            grid=(num_cores, blocks_per_core),
            in_specs=[
                pl.BlockSpec((c, tile_n), lambda core, i: (0, _block(core, i))),        # pred^T
                pl.BlockSpec((1, tile_n), lambda core, i: (0, _block(core, i))),        # weight[labels]
                pl.BlockSpec((ln_neg, tile_n), lambda core, i: (0, _block(core, i))),   # labels_neg^T
            ],
            out_specs=pl.BlockSpec((1, 1), lambda core, i: (core, 0),
                                   memory_space=pltpu.SMEM),
            scratch_shapes=[pltpu.VMEM((1, tile_n), jnp.float32)],      # per-core accumulator
        ),
        compiler_params=pltpu.CompilerParams(
            dimension_semantics=("parallel", "arbitrary"),
            vmem_limit_bytes=32 * 1024 * 1024,
        ),
    )(pred_t, w_i, lneg_t)

    return jnp.sum(partials) / jnp.float32(n)


def _reference(pred, labels, labels_neg, weight):
    """Pure-JAX mirror of the PyTorch NLNL forward (positive term == 0)."""
    pred = pred.astype(jnp.float32)
    p = jax.nn.softmax(pred, axis=1)
    s_neg = jnp.log(jnp.clip(1.0 - p, 1e-5, 1.0))
    s_neg = s_neg * weight[labels][:, None]
    gathered = jnp.take_along_axis(s_neg, labels_neg, axis=1)   # (N, L)
    loss_neg = -jnp.sum(gathered)                               # NLLLoss(mean) * (N*L)
    n = pred.shape[0]
    return loss_neg / n                                         # (0 + loss_neg) / (0 + N)


if __name__ == "__main__":
    key = jax.random.PRNGKey(0)
    k1, k2, k3 = jax.random.split(key, 3)

    batch, num_classes, ln_neg = 8, 10, 1

    pred = jax.random.normal(k1, (batch, num_classes), dtype=jnp.float32) * 2.0
    labels = jax.random.randint(k2, (batch,), 0, num_classes, dtype=jnp.int32)

    # Complementary labels: true label + random offset in [1, C-1] (mod C) -> never the true
    # label.  (Replaces torch.LongTensor(...).random_(1, num_classes) inside the PyTorch forward.)
    offs = jax.random.randint(k3, (batch, ln_neg), 1, num_classes, dtype=jnp.int32)
    labels_neg = (labels[:, None] + offs) % num_classes
    assert bool(jnp.all(labels_neg != labels[:, None]))

    # Per-class weights (the module derives these from the train loader; ones == balanced).
    weight = jnp.ones((num_classes,), jnp.float32)

    loss = nlnl_loss(pred, labels, labels_neg, weight)
    loss = jax.block_until_ready(loss)

    ref = _reference(pred, labels, labels_neg, weight)
    assert jnp.allclose(loss, ref, rtol=1e-3, atol=1e-4), (loss, ref)

    print("KERNEL_OK")
</pallas_src>

<mosaic_0001>
module attributes {stable_mosaic.version = 11 : i64} {
  func.func @_nlnl_kernel(%arg0: i32, %arg1: i32, %arg2: memref<10x8xf32, #tpu.memory_space<vmem>>, %arg3: memref<1x8xf32, #tpu.memory_space<vmem>>, %arg4: memref<1x8xi32, #tpu.memory_space<vmem>>, %arg5: memref<1x1xf32, #tpu.memory_space<smem>>, %arg6: memref<1x8xf32, #tpu.memory_space<vmem>>) attributes {dimension_semantics = [#tpu.dimension_semantics<parallel>, #tpu.dimension_semantics<arbitrary>], iteration_bounds = array<i64: 1, 1>, scalar_prefetch = 0 : i64, scratch_operands = 1 : i64, tpu.core_type = #tpu.core_type<tc>, window_params = [{transform_indices = @transform_0, window_bounds = array<i64: 10, 8>}, {transform_indices = @transform_1, window_bounds = array<i64: 1, 8>}, {transform_indices = @transform_2, window_bounds = array<i64: 1, 8>}, {transform_indices = @transform_3, window_bounds = array<i64: 1, 1>}]} {
    %c0_i32 = arith.constant 0 : i32
    %0 = arith.cmpi eq, %arg1, %c0_i32 : i32
    %1 = arith.extui %0 : i1 to i32
    %c0_i32_0 = arith.constant 0 : i32
    %2 = arith.cmpi ne, %1, %c0_i32_0 : i32
    scf.if %2 {
      %cst_20 = arith.constant 0.000000e+00 : f32
      %47 = vector.broadcast %cst_20 : f32 to vector<1x8xf32>
      %c0_21 = arith.constant 0 : index
      %c0_22 = arith.constant 0 : index
      %48 = vector.load %arg6[%c0_21, %c0_22] : memref<1x8xf32, #tpu.memory_space<vmem>>, vector<1x8xf32>
      tpu.vector_store %arg6[%c0_21, %c0_22], %47 {strides = array<i32>} : memref<1x8xf32, #tpu.memory_space<vmem>>, vector<1x8xf32>,
    } else {
    }
    %c0 = arith.constant 0 : index
    %c0_1 = arith.constant 0 : index
    %3 = vector.load %arg2[%c0, %c0_1] : memref<10x8xf32, #tpu.memory_space<vmem>>, vector<10x8xf32>
    %c0_2 = arith.constant 0 : index
    %c0_3 = arith.constant 0 : index
    %4 = vector.load %arg3[%c0_2, %c0_3] : memref<1x8xf32, #tpu.memory_space<vmem>>, vector<1x8xf32>
    %c0_4 = arith.constant 0 : index
    %c0_5 = arith.constant 0 : index
    %5 = vector.load %arg4[%c0_4, %c0_5] : memref<1x8xi32, #tpu.memory_space<vmem>>, vector<1x8xi32>
    %6 = tpu.iota {dimensions = array<i32: 1>} : vector<1x8xi32>
    %c1_i32 = arith.constant 1 : i32
    %7 = arith.muli %arg0, %c1_i32 : i32
    %8 = arith.addi %7, %arg1 : i32
    %c8_i32 = arith.constant 8 : i32
    %9 = arith.muli %8, %c8_i32 : i32
    %10 = vector.broadcast %9 : i32 to vector<1x8xi32>
    %11 = arith.addi %6, %10 : vector<1x8xi32>
    %c8_i32_6 = arith.constant 8 : i32
    %12 = vector.broadcast %c8_i32_6 : i32 to vector<1x8xi32>
    %13 = arith.cmpi slt, %11, %12 : vector<1x8xi32>
    %14 = tpu.iota {dimensions = array<i32: 0>} : vector<10x8xi32>
    %cst = arith.constant dense<0xFF800000> : vector<8xf32>
    %15 = vector.multi_reduction <maximumf>, %3, %cst [0] : vector<10x8xf32> to vector<8xf32>
    %16 = vector.shape_cast %15 : vector<8xf32> to vector<1x8xf32>
    %17 = vector.broadcast %16 : vector<1x8xf32> to vector<10x8xf32>
    %18 = arith.subf %3, %17 : vector<10x8xf32>
    %19 = math.exp %18 : vector<10x8xf32>
    %cst_7 = arith.constant dense<0.000000e+00> : vector<8xf32>
    %20 = vector.multi_reduction <add>, %19, %cst_7 [0] : vector<10x8xf32> to vector<8xf32>
    %21 = vector.shape_cast %20 : vector<8xf32> to vector<1x8xf32>
    %22 = math.log %21 : vector<1x8xf32>
    %cst_8 = arith.constant 0.000000e+00 : f32
    %23 = vector.broadcast %cst_8 : f32 to vector<1x8xf32>
    %24 = vector.broadcast %5 : vector<1x8xi32> to vector<10x8xi32>
    %25 = arith.cmpi eq, %14, %24 : vector<10x8xi32>
    %cst_9 = arith.constant 0.000000e+00 : f32
    %26 = vector.broadcast %cst_9 : f32 to vector<10x8xf32>
    %27 = arith.select %25, %26, %19 : vector<10x8xi1>, vector<10x8xf32>
    %cst_10 = arith.constant dense<0.000000e+00> : vector<8xf32>
    %28 = vector.multi_reduction <add>, %27, %cst_10 [0] : vector<10x8xf32> to vector<8xf32>
    %29 = vector.shape_cast %28 : vector<8xf32> to vector<1x8xf32>
    %cst_11 = arith.constant 9.99999974E-6 : f32
    %30 = vector.broadcast %cst_11 : f32 to vector<1x8xf32>
    %31 = arith.mulf %30, %21 : vector<1x8xf32>
    %32 = arith.maximumf %29, %31 : vector<1x8xf32>
    %33 = math.log %32 : vector<1x8xf32>
    %34 = arith.subf %33, %22 : vector<1x8xf32>
    %35 = arith.addf %23, %34 : vector<1x8xf32>
    %c0_12 = arith.constant 0 : index
    %c0_13 = arith.constant 0 : index
    %36 = vector.load %arg6[%c0_12, %c0_13] : memref<1x8xf32, #tpu.memory_space<vmem>>, vector<1x8xf32>
    %cst_14 = arith.constant 0.000000e+00 : f32
    %37 = vector.broadcast %cst_14 : f32 to vector<1x8xf32>
    %38 = arith.subf %37, %4 : vector<1x8xf32>
    %39 = arith.mulf %38, %35 : vector<1x8xf32>
    %cst_15 = arith.constant 0.000000e+00 : f32
    %40 = vector.broadcast %cst_15 : f32 to vector<1x8xf32>
    %41 = arith.select %13, %39, %40 : vector<1x8xi1>, vector<1x8xf32>
    %42 = arith.addf %36, %41 : vector<1x8xf32>
    %c0_16 = arith.constant 0 : index
    %c0_17 = arith.constant 0 : index
    %43 = vector.load %arg6[%c0_16, %c0_17] : memref<1x8xf32, #tpu.memory_space<vmem>>, vector<1x8xf32>
    tpu.vector_store %arg6[%c0_16, %c0_17], %42 {strides = array<i32>} : memref<1x8xf32, #tpu.memory_space<vmem>>, vector<1x8xf32>,
    %c0_i32_18 = arith.constant 0 : i32
    %44 = arith.cmpi eq, %arg1, %c0_i32_18 : i32
    %45 = arith.extui %44 : i1 to i32
    %c0_i32_19 = arith.constant 0 : i32
    %46 = arith.cmpi ne, %45, %c0_i32_19 : i32
    scf.if %46 {
      %c0_20 = arith.constant 0 : index
      %c0_21 = arith.constant 0 : index
      %47 = vector.load %arg6[%c0_20, %c0_21] : memref<1x8xf32, #tpu.memory_space<vmem>>, vector<1x8xf32>
      %48 = vector.shape_cast %47 : vector<1x8xf32> to vector<1x1x8xf32>
      %cst_22 = arith.constant dense<0.000000e+00> : vector<1xf32>
      %49 = vector.multi_reduction <add>, %48, %cst_22 [1, 2] : vector<1x1x8xf32> to vector<1xf32>
      %50 = vector.shape_cast %49 : vector<1xf32> to vector<1x1x1xf32>
      %51 = vector.extract %50[0, 0, 0] : f32 from vector<1x1x1xf32>
      %c0_23 = arith.constant 0 : index
      %c0_24 = arith.constant 0 : index
      %52 = memref.load %arg5[%c0_23, %c0_24] : memref<1x1xf32, #tpu.memory_space<smem>>
      memref.store %51, %arg5[%c0_23, %c0_24] : memref<1x1xf32, #tpu.memory_space<smem>>
    } else {
    }
    return
  }
  func.func @transform_0(%arg0: i32, %arg1: i32) -> (i32, i32) {
    %c1_i32 = arith.constant 1 : i32
    %0 = arith.muli %arg0, %c1_i32 : i32
    %1 = arith.addi %0, %arg1 : i32
    %c0_i32 = arith.constant 0 : i32
    %2 = arith.minsi %1, %c0_i32 : i32
    %c0_i32_0 = arith.constant 0 : i32
    %c0_i32_1 = arith.constant 0 : i32
    return %c0_i32_0, %2 : i32, i32
  }
  func.func @transform_1(%arg0: i32, %arg1: i32) -> (i32, i32) {
    %c1_i32 = arith.constant 1 : i32
    %0 = arith.muli %arg0, %c1_i32 : i32
    %1 = arith.addi %0, %arg1 : i32
    %c0_i32 = arith.constant 0 : i32
    %2 = arith.minsi %1, %c0_i32 : i32
    %c0_i32_0 = arith.constant 0 : i32
    %c0_i32_1 = arith.constant 0 : i32
    return %c0_i32_0, %2 : i32, i32
  }
  func.func @transform_2(%arg0: i32, %arg1: i32) -> (i32, i32) {
    %c1_i32 = arith.constant 1 : i32
    %0 = arith.muli %arg0, %c1_i32 : i32
    %1 = arith.addi %0, %arg1 : i32
    %c0_i32 = arith.constant 0 : i32
    %2 = arith.minsi %1, %c0_i32 : i32
    %c0_i32_0 = arith.constant 0 : i32
    %c0_i32_1 = arith.constant 0 : i32
    return %c0_i32_0, %2 : i32, i32
  }
  func.func @transform_3(%arg0: i32, %arg1: i32) -> (i32, i32) {
    %c0_i32 = arith.constant 0 : i32
    %c0_i32_0 = arith.constant 0 : i32
    return %arg0, %c0_i32 : i32, i32
  }
}

</mosaic_0001>

<llo_original>
// kernel: tpu_custom_call.1
$region0: #{tpu_custom_call.1}
  #allocation0 [shape = 'u32[]', space=smem, size = 0x4, offset = 0x4, fixed_abs, tag = 'smem constant byte address 0x4 - core index']
  #allocation1 [shape = 'u32[144,128]{1,0:T(1,128)}', space=vmem, size = 0x12000, scoped, tag = 'internal scratch']
  #allocation2 [shape = 'f32[1,8]{1,0:T(1,128)}', space=vmem, size = 0x200, scoped, tag = 'scratch operand']
  %s0 = inlined_call_operand.vmem [shape: f32[10,8], index: 0, kind: input, shape index: {}]
  %s1 = inlined_call_operand.vmem [shape: f32[1,8], index: 1, kind: input, shape index: {}]
  %s2 = inlined_call_operand.vmem [shape: s32[1,8], index: 2, kind: input, shape index: {}]
  %s3 = inlined_call_operand.hbm [shape: f32[1,1], index: 3, kind: output, shape index: {}]
  %s4 = sld [smem:[#allocation0]]
  $region30: #{tpu_custom_call.1} parent=0
    _
  %s6 = ssub.s32 1, %s4
  %s7 = scalar_select 0, %s6, %s4
  $region1: #{tpu_custom_call.1} parent=0
    #allocation3 [shape = 'u8[512]{0}', space=smem, size = 0x200, scoped, tag = 'output window, operand 0, single buffered']
    #allocation4 [shape = 's32[1]{0}', space=sflag, size = 0x4, scoped, tag = 'scoped memory for tpu_custom_call.1']
    %8 = vsyncpa [#allocation4], 0
    // Predicated region
    $region2: #{tpu_custom_call.1} parent=1 // pred_check
      _
    $region3: #{tpu_custom_call.1} parent=1 // pred_check_branch
      %10 = sbr.rel (0) target = $region5
    $region4: #{tpu_custom_call.1} parent=1 // pred_region
      %s11 = sadd.s32 0, 0
      %p12 = scmp.lt.s32.totalorder %s11, 0
      %s13 = scalar_select %p12, %s11, 0
      %p14 = scmp.lt.s32.totalorder %s13, 0
      %s15 = scalar_select %p14, %s13, 0
      %s16 = smul.addr %s15, 8
      %s17 = scalar_lea.vmem %s0, %s16
      %s18 = sadd.s32 0, 0
      %p19 = scmp.lt.s32.totalorder %s18, 0
      %s20 = scalar_select %p19, %s18, 0
    $region5: #{tpu_custom_call.1} parent=1 // pred_fallthru
      _
    // Predicated region
    $region6: #{tpu_custom_call.1} parent=1 // pred_check
      _
    $region7: #{tpu_custom_call.1} parent=1 // pred_check_branch
      %22 = sbr.rel (0) target = $region9
    $region8: #{tpu_custom_call.1} parent=1 // pred_region
      %s23 = sadd.s32 0, 0
      %p24 = scmp.lt.s32.totalorder %s23, 0
      %s25 = scalar_select %p24, %s23, 0
      %p26 = scmp.lt.s32.totalorder %s25, 0
      %s27 = scalar_select %p26, %s25, 0
      %s28 = scalar_lea.vmem %s1, %s27
      %s29 = sadd.s32 0, 0
      %p30 = scmp.lt.s32.totalorder %s29, 0
      %s31 = scalar_select %p30, %s29, 0
    $region9: #{tpu_custom_call.1} parent=1 // pred_fallthru
      _
    // Predicated region
    $region10: #{tpu_custom_call.1} parent=1 // pred_check
      _
    $region11: #{tpu_custom_call.1} parent=1 // pred_check_branch
      %33 = sbr.rel (0) target = $region13
    $region12: #{tpu_custom_call.1} parent=1 // pred_region
      %s34 = sadd.s32 0, 0
      %p35 = scmp.lt.s32.totalorder %s34, 0
      %s36 = scalar_select %p35, %s34, 0
      %p37 = scmp.lt.s32.totalorder %s36, 0
      %s38 = scalar_select %p37, %s36, 0
      %s39 = scalar_lea.vmem %s2, %s38
      %s40 = sadd.s32 0, 0
      %p41 = scmp.lt.s32.totalorder %s40, 0
      %s42 = scalar_select %p41, %s40, 0
    $region13: #{tpu_custom_call.1} parent=1 // pred_fallthru
      _
    %s43 = sadd.s32 0, 0
    %p44 = scmp.lt.s32.totalorder %s43, 0
    %s45 = scalar_select %p44, %s43, 0
    %p46 = scmp.lt.s32.totalorder %s45, 0
    %s47 = scalar_select %p46, %s45, 0
    %s48 = smul.addr %s47, 8
    %s49 = scalar_lea.vmem %s0, %s48
    %s50 = sadd.s32 0, 0
    %p51 = scmp.lt.s32.totalorder %s50, 0
    %s52 = scalar_select %p51, %s50, 0
    %p53 = scmp.lt.s32.totalorder %s52, 0
    %s54 = scalar_select %p53, %s52, 0
    %s55 = scalar_lea.vmem %s1, %s54
    %s56 = sadd.s32 0, 0
    %p57 = scmp.lt.s32.totalorder %s56, 0
    %s58 = scalar_select %p57, %s56, 0
    %p59 = scmp.lt.s32.totalorder %s58, 0
    %s60 = scalar_select %p59, %s58, 0
    %s61 = scalar_lea.vmem %s2, %s60
    %s62 = sadd.s32 0, 0
    %p63 = scmp.lt.s32.totalorder %s62, 0
    %s64 = scalar_select %p63, %s62, 0
    %p65 = scmp.lt.s32.totalorder %s64, 0
    %s66 = scalar_select %p65, %s64, 0
    %s67 = smul.addr %s66, 8
    %s68 = scalar_lea.vmem %s0, %s67
    %s69 = sadd.s32 0, 0
    %p70 = scmp.lt.s32.totalorder %s69, 0
    %s71 = scalar_select %p70, %s69, 0
    %s72 = sadd.s32 0, 0
    %p73 = scmp.lt.s32.totalorder %s72, 0
    %s74 = scalar_select %p73, %s72, 0
    %p75 = scmp.lt.s32.totalorder %s74, 0
    %s76 = scalar_select %p75, %s74, 0
    %s77 = scalar_lea.vmem %s1, %s76
    %s78 = sadd.s32 0, 0
    %p79 = scmp.lt.s32.totalorder %s78, 0
    %s80 = scalar_select %p79, %s78, 0
    %s81 = sadd.s32 0, 0
    %p82 = scmp.lt.s32.totalorder %s81, 0
    %s83 = scalar_select %p82, %s81, 0
    %p84 = scmp.lt.s32.totalorder %s83, 0
    %s85 = scalar_select %p84, %s83, 0
    %s86 = scalar_lea.vmem %s2, %s85
    %s87 = sadd.s32 0, 0
    %p88 = scmp.lt.s32.totalorder %s87, 0
    %s89 = scalar_select %p88, %s87, 0
    %p90 = scmp.eq.s32.totalorder 0, 0
    // Predicated region
    $region14: #{tpu_custom_call.1} parent=1 // pred_check
      %p91 = pneg %p90
    $region15: #{tpu_custom_call.1} parent=1 // pred_check_branch
      %93 = sbr.rel (%p91) target = $region17
    $region16: #{tpu_custom_call.1} parent=1 // pred_region
      %vm94 = vcmask 57344
      %95 = vst.msk [vmem:[#allocation2] sm:$0x1] %vm94, 0.0
    $region17: #{tpu_custom_call.1} parent=1 // pred_fallthru
      _
    %v96 = vld [vmem:[%s68] sm:$0xff]
    %v97 = vld [vmem:[%s68 + $0x8] sm:$0x3]
    %v98 = vld [vmem:[%s77] sm:$0x1]
    %v99 = vld [vmem:[%s86] sm:$0x1]
    %v100 = vlaneseq
    %v101 = vand.u32 %v100, 127
    %s102 = sadd.s32 0, 0
    %s103 = smul.u32 %s102, 8
    %v104 = vstv %s103
    %v105 = vadd.s32 %v101, %v104
    %vm106 = vcmp.lt.s32.totalorder %v105, 8
    %v107 = vlaneseq
    %v108 = vshrl.u32 %v107, 7
    %v109 = vadd.s32 %v108, 8
    %vm110 = vcmask 64512
    %v111 = vsel %vm110, %v96, -inf
    %vm112 = vcmask 58368
    %v113 = vsel %vm112, %v97, -inf
    %v114 = vmax.f32 %v111, %v113
    %v115 = vrot.slane %v114, 4
    %v116 = vmax.f32 %v114, %v115
    %v117 = vrot.slane %v116, 2
    %v118 = vmax.f32 %v116, %v117
    %v119 = vrot.slane %v118, 1
    %v120 = vmax.f32 %v118, %v119
    %v121 = vsub.f32 %v96, %v120
    %v122 = vsub.f32 %v97, %v120
    %v123 = vmul.f32 %v121, 1.442695
    %v124 = vpow.pop %v123
    %v125 = vmul.f32 %v122, 1.442695
    %v126 = vpow.pop %v125
    %v127 = vsel %vm110, %v124, 0.0
    %v128 = vsel %vm112, %v126, 0.0
    %v129 = vadd.f32 %v127, %v128
    %v130 = vrot.slane %v129, 4
    %v131 = vadd.f32 %v129, %v130
    %v132 = vrot.slane %v131, 2
    %v133 = vadd.f32 %v131, %v132
    %v134 = vrot.slane %v133, 1
    %v135 = vadd.f32 %v133, %v134
    %v136 = vlog2.pop %v135
    %v137 = vmul.f32 %v136, 0.6931472
    %v138 = vlaneseq
    %v139 = vshrl.u32 %v138, 7
    %v140 = vsub.s32 0, %v139
    %v141 = vrot.slane %v99, %v140
    %vm142 = vcmp.eq.s32.totalorder %v108, %v141
    %vm143 = vcmp.eq.s32.totalorder %v109, %v141
    %v144 = vsel %vm142, 0.0, %v124
    %v145 = vsel %vm143, 0.0, %v126
    %v146 = vsel %vm110, %v144, 0.0
    %v147 = vsel %vm112, %v145, 0.0
    %v148 = vadd.f32 %v146, %v147
    %v149 = vrot.slane %v148, 4
    %v150 = vadd.f32 %v148, %v149
    %v151 = vrot.slane %v150, 2
    %v152 = vadd.f32 %v150, %v151
    %v153 = vrot.slane %v152, 1
    %v154 = vadd.f32 %v152, %v153
    %v155 = vmul.f32 %v135, 1e-05
    %v156 = vmax.f32 %v154, %v155
    %v157 = vlog2.pop %v156
    %v158 = vmul.f32 %v157, 0.6931472
    %v159 = vsub.f32 %v158, %v137
    %v160 = vadd.f32 %v159, 0.0
    %v161 = vld [vmem:[#allocation2] sm:$0x1]
    %v162 = vsub.f32 0.0, %v98
    %v163 = vmul.f32 %v162, %v160
    %v164 = vsel %vm106, %v163, 0.0
    %v165 = vadd.f32 %v161, %v164
    %vm166 = vcmask 57344
    %167 = vst.msk [vmem:[#allocation2] sm:$0x1] %vm166, %v165
    // Predicated region
    $region18: #{tpu_custom_call.1} parent=1 // pred_check
      %p168 = pneg %p90
    $region19: #{tpu_custom_call.1} parent=1 // pred_check_branch
      %170 = sbr.rel (%p168) target = $region21
    $region20: #{tpu_custom_call.1} parent=1 // pred_region
      %v171 = vld [vmem:[#allocation2] sm:$0x1]
      %v172 = vsel %vm166, %v171, 0.0
      %173 = vadd.xlane.f32.xlu0 %v172
      %v174 = vpop.xlane.xlu0 %173
      %v175 = vrot.slane %v174, 4
      %v176 = vadd.f32 %v174, %v175
      %v177 = vrot.slane %v176, 2
      %v178 = vadd.f32 %v176, %v177
      %v179 = vrot.slane %v178, 1
      %v180 = vadd.f32 %v178, %v179
      %s181 = vtos %v180
      %s182 = scalar_lea.smem [#allocation3], 0
      %183 = sst [smem:[%s182]] %s181
    $region21: #{tpu_custom_call.1} parent=1 // pred_fallthru
      _
    // Predicated region
    $region22: #{tpu_custom_call.1} parent=1 // pred_check
      _
    $region23: #{tpu_custom_call.1} parent=1 // pred_check_branch
      %185 = sbr.rel (0) target = $region25
    $region24: #{tpu_custom_call.1} parent=1 // pred_region
      %s187 = ssub.s32 16, 16
      %188 = vsyncadd [#allocation4], %s187
      %191 = dma.smem_to_hbm [#allocation3], 16, %s3, [#allocation4]
    $region25: #{tpu_custom_call.1} parent=1 // pred_fallthru
      _
    // Predicated region
    $region26: #{tpu_custom_call.1} parent=1 // pred_check
      _
    $region27: #{tpu_custom_call.1} parent=1 // pred_check_branch
      %193 = sbr.rel (0) target = $region29
    $region28: #{tpu_custom_call.1} parent=1 // pred_region
      %194 = dma.done [#allocation4], 16
    $region29: #{tpu_custom_call.1} parent=1 // pred_fallthru
      _
    %195 = sfence
    %196 = vsyncpa [#allocation4], 1

</llo_original>
